<compile_context>
chip_gen: v7x
topology: tpu7x:2x2x1
jax: 0.10.0
libtpu: 0.0.40
codegen_flags: <defaults>
</compile_context>

<pallas_src>
import jax
import jax.numpy as jnp
from jax.experimental import pallas as pl
from jax.experimental.pallas import tpu as pltpu

BN_EPS = 1e-5


# ------------------------------ Pallas kernel ------------------------------ #
def _make_conv_bn_relu_kernel(tap_offsets, inv_valid):
    """Fused conv (single MXU matmul over stacked taps) + training-mode BN + ReLU.

    tap_offsets : static lane offsets of each conv tap inside the (guard
                  extended) flattened input; (0,) for a 1x1 conv.
    inv_valid   : 1 / (number of valid output positions) for the BN statistics.

    Refs:
      x_ref     : (Cin_p, Mp [+ 2*guard])  channel-major activations, M on lanes
      w_ref     : (Cout_p, T*Cin_p)        taps stacked on the contraction dim
      gamma_ref : (Cout_p, 1)              BN weight
      beta_ref  : (Cout_p, 1)              BN bias
      mask_ref  : (1, Mp)                  1.0 at valid output positions
      o_ref     : (Cout_p, Mp)             lane-dense output
    """

    def kernel(x_ref, w_ref, gamma_ref, beta_ref, mask_ref, o_ref):
        mp = o_ref.shape[1]
        if len(tap_offsets) == 1 and tap_offsets[0] == 0:
            patches = x_ref[...]                              # 1x1 conv: no shifts
        else:
            # 3x3 conv: the shifted views are static lane windows of the guard
            # extended flat activation; stack them on the contraction axis.
            patches = jnp.concatenate(
                [x_ref[:, off:off + mp] for off in tap_offsets], axis=0)

        # One MXU matmul for the whole conv: (Cout_p, K) @ (K, Mp) -> (Cout_p, Mp)
        acc = jnp.dot(w_ref[...], patches, preferred_element_type=jnp.float32)

        # Training-mode BatchNorm: one-pass batch stats over valid (masked)
        # positions of the lane axis; biased variance, like PyTorch.
        msk = mask_ref[...]
        am = acc * msk
        s = jnp.sum(am, axis=1, keepdims=True)
        ss = jnp.sum(am * acc, axis=1, keepdims=True)
        mean = s * inv_valid
        var = jnp.maximum(ss * inv_valid - mean * mean, 0.0)
        scale = jax.lax.rsqrt(var + BN_EPS) * gamma_ref[...]
        y = (acc - mean) * scale + beta_ref[...]
        o_ref[...] = jnp.maximum(y, 0.0).astype(o_ref.dtype)

    return kernel


def _conv_bn_relu_call(kernel, x2d, w2d, gamma, beta, mask, out_dtype):
    cout_p = w2d.shape[0]
    mp = mask.shape[1]
    vmem = pl.BlockSpec(memory_space=pltpu.MemorySpace.VMEM)
    return pl.pallas_call(
        kernel,
        out_shape=jax.ShapeDtypeStruct((cout_p, mp), out_dtype),
        in_specs=[vmem] * 5,
        out_specs=vmem,
    )(x2d, w2d, gamma, beta, mask)


# -------------------------- parameter construction ------------------------- #
def init_basic_conv(key, cin, cout, k):
    kw_, kb_, kg_, kbt_ = jax.random.split(key, 4)
    return dict(
        w=jax.random.normal(kw_, (cout, cin, k, k), jnp.float32) * 0.1,
        # Conv2d bias (default bias=True).  A per-channel constant added before
        # training-mode BatchNorm is exactly cancelled by the batch-mean
        # subtraction, so the kernels never load it (perf review); the pure-JAX
        # reference keeps it and matches.
        b=jax.random.normal(kb_, (cout,), jnp.float32) * 0.1,
        gamma=1.0 + 0.1 * jax.random.normal(kg_, (cout,), jnp.float32),
        beta=0.1 * jax.random.normal(kbt_, (cout,), jnp.float32),
    )


def init_inception_params(key, input_channel, filter_nums):
    f1, fr3, f3, fr5, f5, fpool = filter_nums
    keys = jax.random.split(key, 7)
    return dict(
        branch1x1=init_basic_conv(keys[0], input_channel, f1, 1),
        branch3x3a=init_basic_conv(keys[1], input_channel, fr3, 1),
        branch3x3b=init_basic_conv(keys[2], fr3, f3, 3),
        branch5x5a=init_basic_conv(keys[3], input_channel, fr5, 1),
        branch5x5b=init_basic_conv(keys[4], fr5, f5, 3),
        branch5x5c=init_basic_conv(keys[5], f5, f5, 3),
        branch_pool=init_basic_conv(keys[6], input_channel, fpool, 1),
    )


def _ceil_to(v, mult):
    return ((v + mult - 1) // mult) * mult


def _pad_rows(a, rows):
    return jnp.pad(a, ((0, rows - a.shape[0]),) + ((0, 0),) * (a.ndim - 1))


def prepare_params(params, input_channel, filter_nums):
    """One-time conversion of PyTorch-layout params into kernel layouts
    (hoisted out of the forward pass, per perf review)."""
    f1, fr3, f3, fr5, f5, fpool = filter_nums

    def w1x1(name):
        w = params[name]["w"]
        return w.reshape(w.shape[0], w.shape[1])

    # Fused first stage: the three 1x1 convs that read x, concatenated on Cout.
    names_s1 = ("branch1x1", "branch3x3a", "branch5x5a")
    w_s1 = jnp.concatenate([w1x1(n) for n in names_s1], axis=0)
    g_s1 = jnp.concatenate([params[n]["gamma"] for n in names_s1]).reshape(-1, 1)
    b_s1 = jnp.concatenate([params[n]["beta"] for n in names_s1]).reshape(-1, 1)
    cout_s1 = _ceil_to(w_s1.shape[0], 8)
    prep = dict(
        w_s1=_pad_rows(w_s1, cout_s1),
        g_s1=_pad_rows(g_s1, cout_s1),
        b_s1=_pad_rows(b_s1, cout_s1),
        split_s1=(f1, fr3, fr5),
    )

    def pack3x3(name, w, cout):
        # (Cout, Cin, 3, 3) -> (Cout_p, 9 * Cin_p), tap index t = i*3 + j.
        cin = w.shape[1]
        cin_p, cout_p = _ceil_to(cin, 8), _ceil_to(cout, 8)
        wt = jnp.transpose(w, (0, 2, 3, 1)).reshape(cout, 9, cin)
        wt = jnp.pad(wt, ((0, cout_p - cout), (0, 0), (0, cin_p - cin)))
        prep[name] = dict(
            w=wt.reshape(cout_p, 9 * cin_p),
            gamma=_pad_rows(params[name]["gamma"].reshape(-1, 1), cout_p),
            beta=_pad_rows(params[name]["beta"].reshape(-1, 1), cout_p),
            cin_p=cin_p, cout=cout,
        )

    pack3x3("branch3x3b", params["branch3x3b"]["w"], f3)
    pack3x3("branch5x5b", params["branch5x5b"]["w"], f5)
    pack3x3("branch5x5c", params["branch5x5c"]["w"], f5)
    # avg_pool2d(3, stride=1, pad=1, count_include_pad=True) followed by a 1x1
    # conv == a 3x3 conv whose every tap is w_proj / 9 (pool fused into conv).
    pack3x3("branch_pool",
            jnp.tile(params["branch_pool"]["w"] / 9.0, (1, 1, 3, 3)), fpool)
    return prep


# ------------------------------ forward pass ------------------------------- #
def inception_block(x_nchw, prep):
    n, cin, h, w = x_nchw.shape
    hp, wp = h + 2, w + 2
    m = n * h * w                       # valid output positions
    mp = n * hp * wp                    # padded-grid positions
    guard = wp + 1                      # max |tap offset| in the flat layout
    dt = x_nchw.dtype

    # Channel-major, with N*H*W flattened onto the lane axis (lane-dense).
    xc = jnp.transpose(x_nchw, (1, 0, 2, 3)).reshape(cin, m)

    ones_m = jnp.ones((1, m), jnp.float32)
    mask_mp = jnp.pad(jnp.ones((n, h, w), jnp.float32),
                      ((0, 0), (1, 1), (1, 1))).reshape(1, mp)
    taps9 = tuple(guard + (i - 1) * wp + (j - 1)
                  for i in range(3) for j in range(3))

    k1x1 = _make_conv_bn_relu_kernel((0,), 1.0 / m)
    k3x3 = _make_conv_bn_relu_kernel(taps9, 1.0 / m)

    def to_flat_ext(a_cm, cin_p):
        # (C, M) -> (Cin_p, Mp + 2*guard): zero spatial border (conv padding),
        # zero channel padding, zero guards so every tap window is in bounds.
        a = a_cm.reshape(a_cm.shape[0], n, h, w)
        a = jnp.pad(a, ((0, cin_p - a_cm.shape[0]), (0, 0), (1, 1), (1, 1)))
        return jnp.pad(a.reshape(cin_p, mp), ((0, 0), (guard, guard)))

    def from_flat(o_pad, cout):
        # (Cout_p, Mp) -> (Cout, M): keep interior (valid) positions only.
        o = o_pad[:cout].reshape(cout, n, hp, wp)
        return o[:, :, 1:h + 1, 1:w + 1].reshape(cout, m)

    def conv3x3(a_cm, p):
        xe = to_flat_ext(a_cm, p["cin_p"])
        o = _conv_bn_relu_call(k3x3, xe, p["w"], p["gamma"], p["beta"], mask_mp, dt)
        return from_flat(o, p["cout"])

    # Stage 1: branch1x1 + 3x3-reduce + 5x5-reduce fused into one 1x1 call.
    s1 = _conv_bn_relu_call(k1x1, xc, prep["w_s1"], prep["g_s1"], prep["b_s1"],
                            ones_m, dt)
    f1, fr3, fr5 = prep["split_s1"]
    b1 = s1[:f1]
    r3 = s1[f1:f1 + fr3]
    r5 = s1[f1 + fr3:f1 + fr3 + fr5]

    b3 = conv3x3(r3, prep["branch3x3b"])
    b5 = conv3x3(conv3x3(r5, prep["branch5x5b"]), prep["branch5x5c"])
    bp = conv3x3(xc, prep["branch_pool"])        # avg-pool folded into this conv

    out = jnp.concatenate([b1, b3, b5, bp], axis=0)          # (Ctot, M)
    return jnp.transpose(out.reshape(-1, n, h, w), (1, 0, 2, 3))   # NCHW


# ------------------------- pure-JAX reference check ------------------------ #
def _ref_conv_bn_relu(x, p, pad):
    y = jax.lax.conv_general_dilated(
        x, p["w"], window_strides=(1, 1), padding=[(pad, pad), (pad, pad)],
        dimension_numbers=("NCHW", "OIHW", "NCHW"),
        precision=jax.lax.Precision.HIGHEST)
    y = y + p["b"].reshape(1, -1, 1, 1)
    mean = jnp.mean(y, axis=(0, 2, 3), keepdims=True)
    var = jnp.mean(jnp.square(y - mean), axis=(0, 2, 3), keepdims=True)
    y = (y - mean) * jax.lax.rsqrt(var + BN_EPS)
    y = y * p["gamma"].reshape(1, -1, 1, 1) + p["beta"].reshape(1, -1, 1, 1)
    return jnp.maximum(y, 0.0)


def inception_reference(x, params):
    b1 = _ref_conv_bn_relu(x, params["branch1x1"], 0)
    b3 = _ref_conv_bn_relu(x, params["branch3x3a"], 0)
    b3 = _ref_conv_bn_relu(b3, params["branch3x3b"], 1)
    b5 = _ref_conv_bn_relu(x, params["branch5x5a"], 0)
    b5 = _ref_conv_bn_relu(b5, params["branch5x5b"], 1)
    b5 = _ref_conv_bn_relu(b5, params["branch5x5c"], 1)
    n, c, h, w = x.shape
    xp = jnp.pad(x, ((0, 0), (0, 0), (1, 1), (1, 1)))
    pooled = sum(xp[:, :, i:i + h, j:j + w]
                 for i in range(3) for j in range(3)) / 9.0
    bp = _ref_conv_bn_relu(pooled, params["branch_pool"], 0)
    return jnp.concatenate([b1, b3, b5, bp], axis=1)


if __name__ == "__main__":
    key = jax.random.PRNGKey(0)
    kx, kp = jax.random.split(key)

    input_channel = 4
    filter_nums = (8, 4, 8, 4, 8, 8)   # -> 8 + 8 + 8 + 8 = 32 output channels
    x = jax.random.normal(kx, (2, input_channel, 16, 16), jnp.float32)
    params = init_inception_params(kp, input_channel, filter_nums)
    prep = prepare_params(params, input_channel, filter_nums)

    fwd = jax.jit(lambda inp: inception_block(inp, prep))
    out = jax.block_until_ready(fwd(x))

    expected_cout = filter_nums[0] + filter_nums[2] + filter_nums[4] + filter_nums[5]
    assert out.shape == (2, expected_cout, 16, 16), out.shape
    assert bool(jnp.all(jnp.isfinite(out)))

    # Correctness spot-check against a pure-JAX reference of the PyTorch module
    # (training-mode BN; conv bias included there -- it cancels under BN).
    ref = inception_reference(x, params)
    max_err = float(jnp.max(jnp.abs(out - ref)))
    assert max_err < 1e-2, f"max abs error vs reference: {max_err}"

    print("KERNEL_OK")
</pallas_src>

<mosaic_0001>
module attributes {stable_mosaic.version = 11 : i64} {
  func.func @kernel(%arg0: memref<4x512xf32, #tpu.memory_space<vmem>>, %arg1: memref<16x4xf32, #tpu.memory_space<vmem>>, %arg2: memref<16x1xf32, #tpu.memory_space<vmem>>, %arg3: memref<16x1xf32, #tpu.memory_space<vmem>>, %arg4: memref<1x512xf32, #tpu.memory_space<vmem>>, %arg5: memref<16x512xf32, #tpu.memory_space<vmem>>) attributes {dimension_semantics = [], scalar_prefetch = 0 : i64, scratch_operands = 0 : i64, tpu.core_type = #tpu.core_type<tc>} {
    %c0 = arith.constant 0 : index
    %c0_0 = arith.constant 0 : index
    %0 = vector.load %arg0[%c0, %c0_0] : memref<4x512xf32, #tpu.memory_space<vmem>>, vector<4x512xf32>
    %c0_1 = arith.constant 0 : index
    %c0_2 = arith.constant 0 : index
    %1 = vector.load %arg1[%c0_1, %c0_2] : memref<16x4xf32, #tpu.memory_space<vmem>>, vector<16x4xf32>
    %cst = arith.constant dense<0.000000e+00> : vector<16x512xf32>
    %2 = tpu.matmul %1, %0, %cst {dimension_numbers = #tpu.dot_dimension_numbers<[1], [0], [0], [1], [0, 0, 1, 1], [], []>} : vector<16x4xf32>, vector<4x512xf32>, vector<16x512xf32> -> vector<16x512xf32>
    %c0_3 = arith.constant 0 : index
    %c0_4 = arith.constant 0 : index
    %3 = vector.load %arg4[%c0_3, %c0_4] : memref<1x512xf32, #tpu.memory_space<vmem>>, vector<1x512xf32>
    %4 = vector.broadcast %3 : vector<1x512xf32> to vector<16x512xf32>
    %5 = arith.mulf %2, %4 : vector<16x512xf32>
    %cst_5 = arith.constant dense<0.000000e+00> : vector<16xf32>
    %6 = vector.multi_reduction <add>, %5, %cst_5 [1] : vector<16x512xf32> to vector<16xf32>
    %7 = vector.shape_cast %6 : vector<16xf32> to vector<16x1xf32>
    %8 = arith.mulf %5, %2 : vector<16x512xf32>
    %cst_6 = arith.constant dense<0.000000e+00> : vector<16xf32>
    %9 = vector.multi_reduction <add>, %8, %cst_6 [1] : vector<16x512xf32> to vector<16xf32>
    %10 = vector.shape_cast %9 : vector<16xf32> to vector<16x1xf32>
    %cst_7 = arith.constant 0.001953125 : f32
    %11 = vector.broadcast %cst_7 : f32 to vector<16x1xf32>
    %12 = arith.mulf %7, %11 : vector<16x1xf32>
    %cst_8 = arith.constant 0.001953125 : f32
    %13 = vector.broadcast %cst_8 : f32 to vector<16x1xf32>
    %14 = arith.mulf %10, %13 : vector<16x1xf32>
    %15 = arith.mulf %12, %12 : vector<16x1xf32>
    %16 = arith.subf %14, %15 : vector<16x1xf32>
    %cst_9 = arith.constant 0.000000e+00 : f32
    %17 = vector.broadcast %cst_9 : f32 to vector<16x1xf32>
    %18 = arith.maximumf %16, %17 : vector<16x1xf32>
    %cst_10 = arith.constant 9.99999974E-6 : f32
    %19 = vector.broadcast %cst_10 : f32 to vector<16x1xf32>
    %20 = arith.addf %18, %19 : vector<16x1xf32>
    %21 = math.rsqrt %20 : vector<16x1xf32>
    %c0_11 = arith.constant 0 : index
    %c0_12 = arith.constant 0 : index
    %22 = vector.load %arg2[%c0_11, %c0_12] : memref<16x1xf32, #tpu.memory_space<vmem>>, vector<16x1xf32>
    %23 = arith.mulf %21, %22 : vector<16x1xf32>
    %24 = vector.broadcast %12 : vector<16x1xf32> to vector<16x512xf32>
    %25 = arith.subf %2, %24 : vector<16x512xf32>
    %26 = vector.broadcast %23 : vector<16x1xf32> to vector<16x512xf32>
    %27 = arith.mulf %25, %26 : vector<16x512xf32>
    %c0_13 = arith.constant 0 : index
    %c0_14 = arith.constant 0 : index
    %28 = vector.load %arg3[%c0_13, %c0_14] : memref<16x1xf32, #tpu.memory_space<vmem>>, vector<16x1xf32>
    %29 = vector.broadcast %28 : vector<16x1xf32> to vector<16x512xf32>
    %30 = arith.addf %27, %29 : vector<16x512xf32>
    %cst_15 = arith.constant 0.000000e+00 : f32
    %31 = vector.broadcast %cst_15 : f32 to vector<16x512xf32>
    %32 = arith.maximumf %30, %31 : vector<16x512xf32>
    %c0_16 = arith.constant 0 : index
    %c0_17 = arith.constant 0 : index
    %33 = vector.load %arg5[%c0_16, %c0_17] : memref<16x512xf32, #tpu.memory_space<vmem>>, vector<16x512xf32>
    tpu.vector_store %arg5[%c0_16, %c0_17], %32 {strides = array<i32>} : memref<16x512xf32, #tpu.memory_space<vmem>>, vector<16x512xf32>,
    return
  }
}

module attributes {stable_mosaic.version = 11 : i64} {
  func.func @kernel(%arg0: memref<8x686xf32, #tpu.memory_space<vmem>>, %arg1: memref<8x72xf32, #tpu.memory_space<vmem>>, %arg2: memref<8x1xf32, #tpu.memory_space<vmem>>, %arg3: memref<8x1xf32, #tpu.memory_space<vmem>>, %arg4: memref<1x648xf32, #tpu.memory_space<vmem>>, %arg5: memref<8x648xf32, #tpu.memory_space<vmem>>) attributes {dimension_semantics = [], scalar_prefetch = 0 : i64, scratch_operands = 0 : i64, tpu.core_type = #tpu.core_type<tc>} {
    %c0 = arith.constant 0 : index
    %c0_0 = arith.constant 0 : index
    %0 = vector.load %arg0[%c0, %c0_0] : memref<8x686xf32, #tpu.memory_space<vmem>>, vector<8x648xf32>
    %c0_1 = arith.constant 0 : index
    %c1 = arith.constant 1 : index
    %1 = vector.load %arg0[%c0_1, %c1] : memref<8x686xf32, #tpu.memory_space<vmem>>, vector<8x648xf32>
    %c0_2 = arith.constant 0 : index
    %c2 = arith.constant 2 : index
    %2 = vector.load %arg0[%c0_2, %c2] : memref<8x686xf32, #tpu.memory_space<vmem>>, vector<8x648xf32>
    %c0_3 = arith.constant 0 : index
    %c18 = arith.constant 18 : index
    %3 = vector.load %arg0[%c0_3, %c18] : memref<8x686xf32, #tpu.memory_space<vmem>>, vector<8x648xf32>
    %c0_4 = arith.constant 0 : index
    %c19 = arith.constant 19 : index
    %4 = vector.load %arg0[%c0_4, %c19] : memref<8x686xf32, #tpu.memory_space<vmem>>, vector<8x648xf32>
    %c0_5 = arith.constant 0 : index
    %c20 = arith.constant 20 : index
    %5 = vector.load %arg0[%c0_5, %c20] : memref<8x686xf32, #tpu.memory_space<vmem>>, vector<8x648xf32>
    %c0_6 = arith.constant 0 : index
    %c36 = arith.constant 36 : index
    %6 = vector.load %arg0[%c0_6, %c36] : memref<8x686xf32, #tpu.memory_space<vmem>>, vector<8x648xf32>
    %c0_7 = arith.constant 0 : index
    %c37 = arith.constant 37 : index
    %7 = vector.load %arg0[%c0_7, %c37] : memref<8x686xf32, #tpu.memory_space<vmem>>, vector<8x648xf32>
    %c0_8 = arith.constant 0 : index
    %c38 = arith.constant 38 : index
    %8 = vector.load %arg0[%c0_8, %c38] : memref<8x686xf32, #tpu.memory_space<vmem>>, vector<8x648xf32>
    %9 = tpu.concatenate %0, %1, %2, %3, %4, %5, %6, %7, %8 in 0 : vector<8x648xf32>, vector<8x648xf32>, vector<8x648xf32>, vector<8x648xf32>, vector<8x648xf32>, vector<8x648xf32>, vector<8x648xf32>, vector<8x648xf32>, vector<8x648xf32> -> vector<72x648xf32>
    %c0_9 = arith.constant 0 : index
    %c0_10 = arith.constant 0 : index
    %10 = vector.load %arg1[%c0_9, %c0_10] : memref<8x72xf32, #tpu.memory_space<vmem>>, vector<8x72xf32>
    %cst = arith.constant dense<0.000000e+00> : vector<8x648xf32>
    %11 = tpu.matmul %10, %9, %cst {dimension_numbers = #tpu.dot_dimension_numbers<[1], [0], [0], [1], [0, 0, 1, 1], [], []>} : vector<8x72xf32>, vector<72x648xf32>, vector<8x648xf32> -> vector<8x648xf32>
    %c0_11 = arith.constant 0 : index
    %c0_12 = arith.constant 0 : index
    %12 = vector.load %arg4[%c0_11, %c0_12] : memref<1x648xf32, #tpu.memory_space<vmem>>, vector<1x648xf32>
    %13 = vector.broadcast %12 : vector<1x648xf32> to vector<8x648xf32>
    %14 = arith.mulf %11, %13 : vector<8x648xf32>
    %cst_13 = arith.constant dense<0.000000e+00> : vector<8xf32>
    %15 = vector.multi_reduction <add>, %14, %cst_13 [1] : vector<8x648xf32> to vector<8xf32>
    %16 = vector.shape_cast %15 : vector<8xf32> to vector<8x1xf32>
    %17 = arith.mulf %14, %11 : vector<8x648xf32>
    %cst_14 = arith.constant dense<0.000000e+00> : vector<8xf32>
    %18 = vector.multi_reduction <add>, %17, %cst_14 [1] : vector<8x648xf32> to vector<8xf32>
    %19 = vector.shape_cast %18 : vector<8xf32> to vector<8x1xf32>
    %cst_15 = arith.constant 0.001953125 : f32
    %20 = vector.broadcast %cst_15 : f32 to vector<8x1xf32>
    %21 = arith.mulf %16, %20 : vector<8x1xf32>
    %cst_16 = arith.constant 0.001953125 : f32
    %22 = vector.broadcast %cst_16 : f32 to vector<8x1xf32>
    %23 = arith.mulf %19, %22 : vector<8x1xf32>
    %24 = arith.mulf %21, %21 : vector<8x1xf32>
    %25 = arith.subf %23, %24 : vector<8x1xf32>
    %cst_17 = arith.constant 0.000000e+00 : f32
    %26 = vector.broadcast %cst_17 : f32 to vector<8x1xf32>
    %27 = arith.maximumf %25, %26 : vector<8x1xf32>
    %cst_18 = arith.constant 9.99999974E-6 : f32
    %28 = vector.broadcast %cst_18 : f32 to vector<8x1xf32>
    %29 = arith.addf %27, %28 : vector<8x1xf32>
    %30 = math.rsqrt %29 : vector<8x1xf32>
    %c0_19 = arith.constant 0 : index
    %c0_20 = arith.constant 0 : index
    %31 = vector.load %arg2[%c0_19, %c0_20] : memref<8x1xf32, #tpu.memory_space<vmem>>, vector<8x1xf32>
    %32 = arith.mulf %30, %31 : vector<8x1xf32>
    %33 = vector.broadcast %21 : vector<8x1xf32> to vector<8x648xf32>
    %34 = arith.subf %11, %33 : vector<8x648xf32>
    %35 = vector.broadcast %32 : vector<8x1xf32> to vector<8x648xf32>
    %36 = arith.mulf %34, %35 : vector<8x648xf32>
    %c0_21 = arith.constant 0 : index
    %c0_22 = arith.constant 0 : index
    %37 = vector.load %arg3[%c0_21, %c0_22] : memref<8x1xf32, #tpu.memory_space<vmem>>, vector<8x1xf32>
    %38 = vector.broadcast %37 : vector<8x1xf32> to vector<8x648xf32>
    %39 = arith.addf %36, %38 : vector<8x648xf32>
    %cst_23 = arith.constant 0.000000e+00 : f32
    %40 = vector.broadcast %cst_23 : f32 to vector<8x648xf32>
    %41 = arith.maximumf %39, %40 : vector<8x648xf32>
    %c0_24 = arith.constant 0 : index
    %c0_25 = arith.constant 0 : index
    %42 = vector.load %arg5[%c0_24, %c0_25] : memref<8x648xf32, #tpu.memory_space<vmem>>, vector<8x648xf32>
    tpu.vector_store %arg5[%c0_24, %c0_25], %41 {strides = array<i32>} : memref<8x648xf32, #tpu.memory_space<vmem>>, vector<8x648xf32>,
    return
  }
}

</mosaic_0001>

<llo_original>
// kernel: _lambda_.5
$region0: #{_lambda_.5}
  #allocation0 [shape = 'u32[]', space=smem, size = 0x4, offset = 0x4, fixed_abs, tag = 'smem constant byte address 0x4 - core index']
  #allocation1 [shape = 'u32[144,128]{1,0:T(1,128)}', space=vmem, size = 0x12000, scoped, tag = 'internal scratch']
  %s0 = inlined_call_operand.vmem [shape: f32[4,512], index: 0, kind: input, shape index: {}]
  %s1 = inlined_call_operand.vmem [shape: f32[16,4], index: 1, kind: input, shape index: {}]
  %s2 = inlined_call_operand.vmem [shape: f32[16,1], index: 2, kind: input, shape index: {}]
  %s3 = inlined_call_operand.vmem [shape: f32[16,1], index: 3, kind: input, shape index: {}]
  %s4 = inlined_call_operand.vmem [shape: f32[1,512], index: 4, kind: input, shape index: {}]
  %s5 = inlined_call_operand.vmem [shape: f32[16,512], index: 5, kind: output, shape index: {}]
  %s6 = sld [smem:[#allocation0]]
  $region30: #{_lambda_.5} parent=0
    _
  %s8 = ssub.s32 1, %s6
  %s9 = scalar_select 0, %s8, %s6
  // Predicated region
  $region2: #{_lambda_.5} parent=0 // pred_check
    _
  $region3: #{_lambda_.5} parent=0 // pred_check_branch
    %11 = sbr.rel (0) target = $region5
  $region4: #{_lambda_.5} parent=0 // pred_region
    _
  $region5: #{_lambda_.5} parent=0 // pred_fallthru
    _
  // Predicated region
  $region6: #{_lambda_.5} parent=0 // pred_check
    _
  $region7: #{_lambda_.5} parent=0 // pred_check_branch
    %13 = sbr.rel (0) target = $region9
  $region8: #{_lambda_.5} parent=0 // pred_region
    _
  $region9: #{_lambda_.5} parent=0 // pred_fallthru
    _
  // Predicated region
  $region10: #{_lambda_.5} parent=0 // pred_check
    _
  $region11: #{_lambda_.5} parent=0 // pred_check_branch
    %15 = sbr.rel (0) target = $region13
  $region12: #{_lambda_.5} parent=0 // pred_region
    _
  $region13: #{_lambda_.5} parent=0 // pred_fallthru
    _
  // Predicated region
  $region14: #{_lambda_.5} parent=0 // pred_check
    _
  $region15: #{_lambda_.5} parent=0 // pred_check_branch
    %17 = sbr.rel (0) target = $region17
  $region16: #{_lambda_.5} parent=0 // pred_region
    _
  $region17: #{_lambda_.5} parent=0 // pred_fallthru
    _
  // Predicated region
  $region18: #{_lambda_.5} parent=0 // pred_check
    _
  $region19: #{_lambda_.5} parent=0 // pred_check_branch
    %19 = sbr.rel (0) target = $region21
  $region20: #{_lambda_.5} parent=0 // pred_region
    _
  $region21: #{_lambda_.5} parent=0 // pred_fallthru
    _
  %v20 = vld [vmem:[%s0] sm:$0xff]
  %v21 = vld [vmem:[%s0 + $0x8] sm:$0xff]
  %v22 = vld [vmem:[%s1] sm:$0xff]
  %v23 = vld [vmem:[%s1 + $0x8] sm:$0xff]
  %v26 = vcombine.high %v20, %v20
  %v27 = vcombine.high %v21, %v21
  %vm28 = vcmask 31744
  %v30 = vsel %vm28, %v22, 0
  %v33 = vsel %vm28, %v23, 0
  %vm35 = vcmask 1043456
  %v36 = vsel %vm35, %v20, 0
  %v38 = vsel %vm35, %v26, 0
  %v40 = vsel %vm35, %v21, 0
  %v42 = vsel %vm35, %v27, 0
  %44 = vmatprep.subr.mxu0 %v38
  %45 = vmatpush1.msra.mxu0 %v36
  %46 = vmatprep.subr.mxu0 0.0
  %47 = vmatpush1.msra.mxu0 0.0
  %48 = vmatprep.subr.mxu0 0.0
  %49 = vmatpush1.msra.mxu0 0.0
  %50 = vmatprep.subr.mxu0 0.0
  %51 = vmatpush1.msra.mxu0 0.0
  %52 = vmatprep.subr.mxu0 0.0
  %53 = vmatpush1.msra.mxu0 0.0
  %54 = vmatprep.subr.mxu0 0.0
  %55 = vmatpush1.msra.mxu0 0.0
  %56 = vmatprep.subr.mxu0 0.0
  %57 = vmatpush1.msra.mxu0 0.0
  %58 = vmatprep.subr.mxu0 0.0
  %59 = vmatpush1.msra.mxu0 0.0
  %60 = vmatprep.subr.mxu0 0.0
  %61 = vmatpush1.msra.mxu0 0.0
  %62 = vmatprep.subr.mxu0 0.0
  %63 = vmatpush1.msra.mxu0 0.0
  %64 = vmatprep.subr.mxu0 0.0
  %65 = vmatpush1.msra.mxu0 0.0
  %66 = vmatprep.subr.mxu0 0.0
  %67 = vmatpush1.msra.mxu0 0.0
  %68 = vmatprep.subr.mxu0 0.0
  %69 = vmatpush1.msra.mxu0 0.0
  %70 = vmatprep.subr.mxu0 0.0
  %71 = vmatpush1.msra.mxu0 0.0
  %72 = vmatprep.subr.mxu0 0.0
  %73 = vmatpush1.msra.mxu0 0.0
  %74 = vmatprep.subr.mxu0 0.0
  %75 = vmatpush1.msra.mxu0 0.0
  %76 = vmatprep.subr.mxu0 0.0
  %77 = vmatpush1.msra.mxu0 0.0
  %78 = vmatprep.subr.mxu0 0.0
  %79 = vmatpush1.msra.mxu0 0.0
  %80 = vmatprep.subr.mxu0 0.0
  %81 = vmatpush1.msra.mxu0 0.0
  %82 = vmatprep.subr.mxu0 0.0
  %83 = vmatpush1.msra.mxu0 0.0
  %84 = vmatprep.subr.mxu0 0.0
  %85 = vmatpush1.msra.mxu0 0.0
  %86 = vmatprep.subr.mxu0 0.0
  %87 = vmatpush1.msra.mxu0 0.0
  %88 = vmatprep.subr.mxu0 0.0
  %89 = vmatpush1.msra.mxu0 0.0
  %90 = vmatprep.subr.mxu0 0.0
  %91 = vmatpush1.msra.mxu0 0.0
  %92 = vmatprep.subr.mxu0 0.0
  %93 = vmatpush1.msra.mxu0 0.0
  %94 = vmatprep.subr.mxu0 0.0
  %95 = vmatpush1.msra.mxu0 0.0
  %96 = vmatprep.subr.mxu0 0.0
  %97 = vmatpush1.msra.mxu0 0.0
  %98 = vmatprep.subr.mxu0 0.0
  %99 = vmatpush1.msra.mxu0 0.0
  %100 = vmatprep.subr.mxu0 0.0
  %101 = vmatpush1.msra.mxu0 0.0
  %102 = vmatprep.subr.mxu0 0.0
  %103 = vmatpush1.msra.mxu0 0.0
  %104 = vmatprep.subr.mxu0 0.0
  %105 = vmatpush1.msra.mxu0 0.0
  %106 = vmatprep.subr.mxu0 0.0
  %107 = vmatpush1.msra.mxu0 0.0
  %108 = vmatprep.mubr.f32.mxu0 0.0
  %109 = vmatmul.mubr.f32.gmra.mrb[0].mxu0 %v30
  %v110 = vpop.f32.mrb[0].mxu0
  %v111 = vadd.f32 0.0, %v110
  %v112 = vpop.f32.mrb[0].mxu0
  %v113 = vadd.f32 0.0, %v112
  %114 = vmatprep.mubr.f32.mxu0 0.0
  %115 = vmatmul.mubr.f32.gmra.mrb[0].mxu0 %v33
  %v116 = vpop.f32.mrb[0].mxu0
  %v117 = vadd.f32 0.0, %v116
  %v118 = vpop.f32.mrb[0].mxu0
  %v119 = vadd.f32 0.0, %v118
  %120 = vdwg.mxu0
  %121 = vmatprep.subr.mxu0 %v42
  %122 = vmatpush1.msra.mxu0 %v40
  %123 = vmatprep.subr.mxu0 0.0
  %124 = vmatpush1.msra.mxu0 0.0
  %125 = vmatprep.subr.mxu0 0.0
  %126 = vmatpush1.msra.mxu0 0.0
  %127 = vmatprep.subr.mxu0 0.0
  %128 = vmatpush1.msra.mxu0 0.0
  %129 = vmatprep.subr.mxu0 0.0
  %130 = vmatpush1.msra.mxu0 0.0
  %131 = vmatprep.subr.mxu0 0.0
  %132 = vmatpush1.msra.mxu0 0.0
  %133 = vmatprep.subr.mxu0 0.0
  %134 = vmatpush1.msra.mxu0 0.0
  %135 = vmatprep.subr.mxu0 0.0
  %136 = vmatpush1.msra.mxu0 0.0
  %137 = vmatprep.subr.mxu0 0.0
  %138 = vmatpush1.msra.mxu0 0.0
  %139 = vmatprep.subr.mxu0 0.0
  %140 = vmatpush1.msra.mxu0 0.0
  %141 = vmatprep.subr.mxu0 0.0
  %142 = vmatpush1.msra.mxu0 0.0
  %143 = vmatprep.subr.mxu0 0.0
  %144 = vmatpush1.msra.mxu0 0.0
  %145 = vmatprep.subr.mxu0 0.0
  %146 = vmatpush1.msra.mxu0 0.0
  %147 = vmatprep.subr.mxu0 0.0
  %148 = vmatpush1.msra.mxu0 0.0
  %149 = vmatprep.subr.mxu0 0.0
  %150 = vmatpush1.msra.mxu0 0.0
  %151 = vmatprep.subr.mxu0 0.0
  %152 = vmatpush1.msra.mxu0 0.0
  %153 = vmatprep.subr.mxu0 0.0
  %154 = vmatpush1.msra.mxu0 0.0
  %155 = vmatprep.subr.mxu0 0.0
  %156 = vmatpush1.msra.mxu0 0.0
  %157 = vmatprep.subr.mxu0 0.0
  %158 = vmatpush1.msra.mxu0 0.0
  %159 = vmatprep.subr.mxu0 0.0
  %160 = vmatpush1.msra.mxu0 0.0
  %161 = vmatprep.subr.mxu0 0.0
  %162 = vmatpush1.msra.mxu0 0.0
  %163 = vmatprep.subr.mxu0 0.0
  %164 = vmatpush1.msra.mxu0 0.0
  %165 = vmatprep.subr.mxu0 0.0
  %166 = vmatpush1.msra.mxu0 0.0
  %167 = vmatprep.subr.mxu0 0.0
  %168 = vmatpush1.msra.mxu0 0.0
  %169 = vmatprep.subr.mxu0 0.0
  %170 = vmatpush1.msra.mxu0 0.0
  %171 = vmatprep.subr.mxu0 0.0
  %172 = vmatpush1.msra.mxu0 0.0
  %173 = vmatprep.subr.mxu0 0.0
  %174 = vmatpush1.msra.mxu0 0.0
  %175 = vmatprep.subr.mxu0 0.0
  %176 = vmatpush1.msra.mxu0 0.0
  %177 = vmatprep.subr.mxu0 0.0
  %178 = vmatpush1.msra.mxu0 0.0
  %179 = vmatprep.subr.mxu0 0.0
  %180 = vmatpush1.msra.mxu0 0.0
  %181 = vmatprep.subr.mxu0 0.0
  %182 = vmatpush1.msra.mxu0 0.0
  %183 = vmatprep.subr.mxu0 0.0
  %184 = vmatpush1.msra.mxu0 0.0
  %185 = vmatprep.mubr.f32.mxu0 0.0
  %186 = vmatmul.mubr.f32.gmra.mrb[0].mxu0 %v30
  %v187 = vpop.f32.mrb[0].mxu0
  %v188 = vadd.f32 0.0, %v187
  %v189 = vpop.f32.mrb[0].mxu0
  %v190 = vadd.f32 0.0, %v189
  %191 = vmatprep.mubr.f32.mxu0 0.0
  %192 = vmatmul.mubr.f32.gmra.mrb[0].mxu0 %v33
  %v193 = vpop.f32.mrb[0].mxu0
  %v194 = vadd.f32 0.0, %v193
  %v195 = vpop.f32.mrb[0].mxu0
  %v196 = vadd.f32 0.0, %v195
  %197 = vdwg.mxu0
  %v198 = vld [vmem:[%s4] sm:$0xf]
  %v200 = vlaneseq
  %v201 = vshrl.u32 %v200, 7
  %v202 = vsub.s32 0, %v201
  %v203 = vrot.slane %v198, %v202
  %v204 = vlaneseq
  %v205 = vshrl.u32 %v204, 7
  %v206 = vsub.s32 1, %v205
  %v207 = vrot.slane %v198, %v206
  %v208 = vlaneseq
  %v209 = vshrl.u32 %v208, 7
  %v210 = vsub.s32 2, %v209
  %v211 = vrot.slane %v198, %v210
  %v212 = vlaneseq
  %v213 = vshrl.u32 %v212, 7
  %v214 = vsub.s32 3, %v213
  %v215 = vrot.slane %v198, %v214
  %v220 = vmul.f32 %v111, %v203
  %v221 = vmul.f32 %v113, %v207
  %v222 = vmul.f32 %v188, %v211
  %v223 = vmul.f32 %v190, %v215
  %v224 = vmul.f32 %v117, %v203
  %v225 = vmul.f32 %v119, %v207
  %v226 = vmul.f32 %v194, %v211
  %v227 = vmul.f32 %v196, %v215
  %v228 = vadd.f32 %v220, %v221
  %v229 = vadd.f32 %v228, %v222
  %v230 = vadd.f32 %v229, %v223
  %231 = vadd.xlane.f32.xlu0 %v230
  %v232 = vpop.xlane.xlu0 %231
  %v233 = vadd.f32 %v224, %v225
  %v234 = vadd.f32 %v233, %v226
  %v235 = vadd.f32 %v234, %v227
  %236 = vadd.xlane.f32.xlu0 %v235
  %v237 = vpop.xlane.xlu0 %236
  %v238 = vmul.f32 %v220, %v111
  %v239 = vmul.f32 %v221, %v113
  %v240 = vmul.f32 %v222, %v188
  %v241 = vmul.f32 %v223, %v190
  %v242 = vmul.f32 %v224, %v117
  %v243 = vmul.f32 %v225, %v119
  %v244 = vmul.f32 %v226, %v194
  %v245 = vmul.f32 %v227, %v196
  %v246 = vadd.f32 %v238, %v239
  %v247 = vadd.f32 %v246, %v240
  %v248 = vadd.f32 %v247, %v241
  %249 = vadd.xlane.f32.xlu0 %v248
  %v250 = vpop.xlane.xlu0 %249
  %v251 = vadd.f32 %v242, %v243
  %v252 = vadd.f32 %v251, %v244
  %v253 = vadd.f32 %v252, %v245
  %254 = vadd.xlane.f32.xlu0 %v253
  %v255 = vpop.xlane.xlu0 %254
  %v256 = vmul.f32 %v232, 0.001953125
  %v257 = vmul.f32 %v237, 0.001953125
  %v258 = vmul.f32 %v250, 0.001953125
  %v259 = vmul.f32 %v255, 0.001953125
  %v260 = vmul.f32 %v256, %v256
  %v261 = vmul.f32 %v257, %v257
  %v262 = vsub.f32 %v258, %v260
  %v263 = vsub.f32 %v259, %v261
  %v264 = vmax.f32 %v262, 0.0
  %v265 = vmax.f32 %v263, 0.0
  %v266 = vadd.f32 %v264, 1e-05
  %v267 = vadd.f32 %v265, 1e-05
  %v268 = vrsqrt.pop %v266
  %v269 = vrsqrt.pop %v267
  %v270 = vld [vmem:[%s2] sm:$0xff]
  %v271 = vld [vmem:[%s2 + $0x8] sm:$0xff]
  %v272 = vmul.f32 %v268, %v270
  %v273 = vmul.f32 %v269, %v271
  %v274 = vsub.f32 %v111, %v256
  %v275 = vsub.f32 %v113, %v256
  %v276 = vsub.f32 %v188, %v256
  %v277 = vsub.f32 %v190, %v256
  %v278 = vsub.f32 %v117, %v257
  %v279 = vsub.f32 %v119, %v257
  %v280 = vsub.f32 %v194, %v257
  %v281 = vsub.f32 %v196, %v257
  %283 = vset.pattern.permute.xlu0 0
  %284 = vperm.xlu0 %283, %v272
  %v285 = vpop.permute.xlu0 %284
  %288 = vset.pattern.permute.xlu0 0
  %289 = vperm.xlu0 %288, %v273
  %v290 = vpop.permute.xlu0 %289
  %v292 = vmul.f32 %v274, %v285
  %v293 = vmul.f32 %v275, %v285
  %v294 = vmul.f32 %v276, %v285
  %v295 = vmul.f32 %v277, %v285
  %v296 = vmul.f32 %v278, %v290
  %v297 = vmul.f32 %v279, %v290
  %v298 = vmul.f32 %v280, %v290
  %v299 = vmul.f32 %v281, %v290
  %v300 = vld [vmem:[%s3] sm:$0xff]
  %v301 = vld [vmem:[%s3 + $0x8] sm:$0xff]
  %303 = vset.pattern.permute.xlu0 0
  %304 = vperm.xlu0 %303, %v300
  %v305 = vpop.permute.xlu0 %304
  %308 = vset.pattern.permute.xlu0 0
  %309 = vperm.xlu0 %308, %v301
  %v310 = vpop.permute.xlu0 %309
  %v312 = vadd.f32 %v292, %v305
  %v313 = vadd.f32 %v293, %v305
  %v314 = vadd.f32 %v294, %v305
  %v315 = vadd.f32 %v295, %v305
  %v316 = vadd.f32 %v296, %v310
  %v317 = vadd.f32 %v297, %v310
  %v318 = vadd.f32 %v298, %v310
  %v319 = vadd.f32 %v299, %v310
  %v320 = vmax.f32 %v312, 0.0
  %v321 = vmax.f32 %v313, 0.0
  %v322 = vmax.f32 %v314, 0.0
  %v323 = vmax.f32 %v315, 0.0
  %v324 = vmax.f32 %v316, 0.0
  %v325 = vmax.f32 %v317, 0.0
  %v326 = vmax.f32 %v318, 0.0
  %v327 = vmax.f32 %v319, 0.0
  %328 = vst [vmem:[%s5] sm:$0xff] %v320
  %329 = vst [vmem:[%s5 + $0x8] sm:$0xff] %v321
  %330 = vst [vmem:[%s5 + $0x10] sm:$0xff] %v322
  %331 = vst [vmem:[%s5 + $0x18] sm:$0xff] %v323
  %332 = vst [vmem:[%s5 + $0x20] sm:$0xff] %v324
  %333 = vst [vmem:[%s5 + $0x28] sm:$0xff] %v325
  %334 = vst [vmem:[%s5 + $0x30] sm:$0xff] %v326
  %335 = vst [vmem:[%s5 + $0x38] sm:$0xff] %v327
  // Predicated region
  $region22: #{_lambda_.5} parent=0 // pred_check
    _
  $region23: #{_lambda_.5} parent=0 // pred_check_branch
    %337 = sbr.rel (0) target = $region25
  $region24: #{_lambda_.5} parent=0 // pred_region
    _
  $region25: #{_lambda_.5} parent=0 // pred_fallthru
    _
  // Predicated region
  $region26: #{_lambda_.5} parent=0 // pred_check
    _
  $region27: #{_lambda_.5} parent=0 // pred_check_branch
    %339 = sbr.rel (0) target = $region29
  $region28: #{_lambda_.5} parent=0 // pred_region
    _
  $region29: #{_lambda_.5} parent=0 // pred_fallthru
    _

// kernel: _lambda_.7
$region0: #{_lambda_.7}
  #allocation0 [shape = 'u32[]', space=smem, size = 0x4, offset = 0x4, fixed_abs, tag = 'smem constant byte address 0x4 - core index']
  #allocation1 [shape = 'u32[144,128]{1,0:T(1,128)}', space=vmem, size = 0x12000, scoped, tag = 'internal scratch']
  %s0 = inlined_call_operand.vmem [shape: f32[8,686], index: 0, kind: input, shape index: {}]
  %s1 = inlined_call_operand.vmem [shape: f32[8,72], index: 1, kind: input, shape index: {}]
  %s2 = inlined_call_operand.vmem [shape: f32[8,1], index: 2, kind: input, shape index: {}]
  %s3 = inlined_call_operand.vmem [shape: f32[8,1], index: 3, kind: input, shape index: {}]
  %s4 = inlined_call_operand.vmem [shape: f32[1,648], index: 4, kind: input, shape index: {}]
  %s5 = inlined_call_operand.vmem [shape: f32[8,648], index: 5, kind: output, shape index: {}]
  %s6 = sld [smem:[#allocation0]]
  $region30: #{_lambda_.7} parent=0
    _
  %s8 = ssub.s32 1, %s6
  %s9 = scalar_select 0, %s8, %s6
  // Predicated region
  $region2: #{_lambda_.7} parent=0 // pred_check
    _
  $region3: #{_lambda_.7} parent=0 // pred_check_branch
    %11 = sbr.rel (0) target = $region5
  $region4: #{_lambda_.7} parent=0 // pred_region
    _
  $region5: #{_lambda_.7} parent=0 // pred_fallthru
    _
  // Predicated region
  $region6: #{_lambda_.7} parent=0 // pred_check
    _
  $region7: #{_lambda_.7} parent=0 // pred_check_branch
    %13 = sbr.rel (0) target = $region9
  $region8: #{_lambda_.7} parent=0 // pred_region
    _
  $region9: #{_lambda_.7} parent=0 // pred_fallthru
    _
  // Predicated region
  $region10: #{_lambda_.7} parent=0 // pred_check
    _
  $region11: #{_lambda_.7} parent=0 // pred_check_branch
    %15 = sbr.rel (0) target = $region13
  $region12: #{_lambda_.7} parent=0 // pred_region
    _
  $region13: #{_lambda_.7} parent=0 // pred_fallthru
    _
  // Predicated region
  $region14: #{_lambda_.7} parent=0 // pred_check
    _
  $region15: #{_lambda_.7} parent=0 // pred_check_branch
    %17 = sbr.rel (0) target = $region17
  $region16: #{_lambda_.7} parent=0 // pred_region
    _
  $region17: #{_lambda_.7} parent=0 // pred_fallthru
    _
  // Predicated region
  $region18: #{_lambda_.7} parent=0 // pred_check
    _
  $region19: #{_lambda_.7} parent=0 // pred_check_branch
    %19 = sbr.rel (0) target = $region21
  $region20: #{_lambda_.7} parent=0 // pred_region
    _
  $region21: #{_lambda_.7} parent=0 // pred_fallthru
    _
  %v20 = vld [vmem:[%s0] sm:$0xff]
  %v21 = vld [vmem:[%s0 + $0x8] sm:$0xff]
  %v22 = vld [vmem:[%s0 + $0x10] sm:$0xff]
  %v23 = vld [vmem:[%s0 + $0x18] sm:$0xff]
  %v24 = vld [vmem:[%s0 + $0x20] sm:$0xff]
  %v25 = vld [vmem:[%s0 + $0x28] sm:$0xff]
  %32 = vrot.lane.b32.xlu0 %v20, 127
  %v33 = vpop.permute.xlu0 %32
  %34 = vrot.lane.b32.xlu0 %v21, 127
  %v35 = vpop.permute.xlu0 %34
  %36 = vrot.lane.b32.xlu0 %v22, 127
  %v37 = vpop.permute.xlu0 %36
  %38 = vrot.lane.b32.xlu0 %v23, 127
  %v39 = vpop.permute.xlu0 %38
  %40 = vrot.lane.b32.xlu0 %v24, 127
  %v41 = vpop.permute.xlu0 %40
  %42 = vrot.lane.b32.xlu0 %v25, 127
  %v43 = vpop.permute.xlu0 %42
  %vm44 = vcmask 1039360
  %v45 = vsel %vm44, %v33, %v35
  %v46 = vsel %vm44, %v35, %v37
  %v47 = vsel %vm44, %v37, %v39
  %v48 = vsel %vm44, %v39, %v41
  %v49 = vsel %vm44, %v41, %v43
  %56 = vrot.lane.b32.xlu0 %v20, 126
  %v57 = vpop.permute.xlu0 %56
  %58 = vrot.lane.b32.xlu0 %v21, 126
  %v59 = vpop.permute.xlu0 %58
  %60 = vrot.lane.b32.xlu0 %v22, 126
  %v61 = vpop.permute.xlu0 %60
  %62 = vrot.lane.b32.xlu0 %v23, 126
  %v63 = vpop.permute.xlu0 %62
  %64 = vrot.lane.b32.xlu0 %v24, 126
  %v65 = vpop.permute.xlu0 %64
  %66 = vrot.lane.b32.xlu0 %v25, 126
  %v67 = vpop.permute.xlu0 %66
  %vm68 = vcmask 1031168
  %v69 = vsel %vm68, %v57, %v59
  %v70 = vsel %vm68, %v59, %v61
  %v71 = vsel %vm68, %v61, %v63
  %v72 = vsel %vm68, %v63, %v65
  %v73 = vsel %vm68, %v65, %v67
  %80 = vrot.lane.b32.xlu0 %v20, 110
  %v81 = vpop.permute.xlu0 %80
  %82 = vrot.lane.b32.xlu0 %v21, 110
  %v83 = vpop.permute.xlu0 %82
  %84 = vrot.lane.b32.xlu0 %v22, 110
  %v85 = vpop.permute.xlu0 %84
  %86 = vrot.lane.b32.xlu0 %v23, 110
  %v87 = vpop.permute.xlu0 %86
  %88 = vrot.lane.b32.xlu0 %v24, 110
  %v89 = vpop.permute.xlu0 %88
  %90 = vrot.lane.b32.xlu0 %v25, 110
  %v91 = vpop.permute.xlu0 %90
  %vm92 = vcmask 900096
  %v93 = vsel %vm92, %v81, %v83
  %v94 = vsel %vm92, %v83, %v85
  %v95 = vsel %vm92, %v85, %v87
  %v96 = vsel %vm92, %v87, %v89
  %v97 = vsel %vm92, %v89, %v91
  %104 = vrot.lane.b32.xlu0 %v20, 109
  %v105 = vpop.permute.xlu0 %104
  %106 = vrot.lane.b32.xlu0 %v21, 109
  %v107 = vpop.permute.xlu0 %106
  %108 = vrot.lane.b32.xlu0 %v22, 109
  %v109 = vpop.permute.xlu0 %108
  %110 = vrot.lane.b32.xlu0 %v23, 109
  %v111 = vpop.permute.xlu0 %110
  %112 = vrot.lane.b32.xlu0 %v24, 109
  %v113 = vpop.permute.xlu0 %112
  %114 = vrot.lane.b32.xlu0 %v25, 109
  %v115 = vpop.permute.xlu0 %114
  %vm116 = vcmask 891904
  %v117 = vsel %vm116, %v105, %v107
  %v118 = vsel %vm116, %v107, %v109
  %v119 = vsel %vm116, %v109, %v111
  %v120 = vsel %vm116, %v111, %v113
  %v121 = vsel %vm116, %v113, %v115
  %128 = vrot.lane.b32.xlu0 %v20, 108
  %v129 = vpop.permute.xlu0 %128
  %130 = vrot.lane.b32.xlu0 %v21, 108
  %v131 = vpop.permute.xlu0 %130
  %132 = vrot.lane.b32.xlu0 %v22, 108
  %v133 = vpop.permute.xlu0 %132
  %134 = vrot.lane.b32.xlu0 %v23, 108
  %v135 = vpop.permute.xlu0 %134
  %136 = vrot.lane.b32.xlu0 %v24, 108
  %v137 = vpop.permute.xlu0 %136
  %138 = vrot.lane.b32.xlu0 %v25, 108
  %v139 = vpop.permute.xlu0 %138
  %vm140 = vcmask 883712
  %v141 = vsel %vm140, %v129, %v131
  %v142 = vsel %vm140, %v131, %v133
  %v143 = vsel %vm140, %v133, %v135
  %v144 = vsel %vm140, %v135, %v137
  %v145 = vsel %vm140, %v137, %v139
  %152 = vrot.lane.b32.xlu0 %v20, 92
  %v153 = vpop.permute.xlu0 %152
  %154 = vrot.lane.b32.xlu0 %v21, 92
  %v155 = vpop.permute.xlu0 %154
  %156 = vrot.lane.b32.xlu0 %v22, 92
  %v157 = vpop.permute.xlu0 %156
  %158 = vrot.lane.b32.xlu0 %v23, 92
  %v159 = vpop.permute.xlu0 %158
  %160 = vrot.lane.b32.xlu0 %v24, 92
  %v161 = vpop.permute.xlu0 %160
  %162 = vrot.lane.b32.xlu0 %v25, 92
  %v163 = vpop.permute.xlu0 %162
  %vm164 = vcmask 752640
  %v165 = vsel %vm164, %v153, %v155
  %v166 = vsel %vm164, %v155, %v157
  %v167 = vsel %vm164, %v157, %v159
  %v168 = vsel %vm164, %v159, %v161
  %v169 = vsel %vm164, %v161, %v163
  %176 = vrot.lane.b32.xlu0 %v20, 91
  %v177 = vpop.permute.xlu0 %176
  %178 = vrot.lane.b32.xlu0 %v21, 91
  %v179 = vpop.permute.xlu0 %178
  %180 = vrot.lane.b32.xlu0 %v22, 91
  %v181 = vpop.permute.xlu0 %180
  %182 = vrot.lane.b32.xlu0 %v23, 91
  %v183 = vpop.permute.xlu0 %182
  %184 = vrot.lane.b32.xlu0 %v24, 91
  %v185 = vpop.permute.xlu0 %184
  %186 = vrot.lane.b32.xlu0 %v25, 91
  %v187 = vpop.permute.xlu0 %186
  %vm188 = vcmask 744448
  %v189 = vsel %vm188, %v177, %v179
  %v190 = vsel %vm188, %v179, %v181
  %v191 = vsel %vm188, %v181, %v183
  %v192 = vsel %vm188, %v183, %v185
  %v193 = vsel %vm188, %v185, %v187
  %200 = vrot.lane.b32.xlu0 %v20, 90
  %v201 = vpop.permute.xlu0 %200
  %202 = vrot.lane.b32.xlu0 %v21, 90
  %v203 = vpop.permute.xlu0 %202
  %204 = vrot.lane.b32.xlu0 %v22, 90
  %v205 = vpop.permute.xlu0 %204
  %206 = vrot.lane.b32.xlu0 %v23, 90
  %v207 = vpop.permute.xlu0 %206
  %208 = vrot.lane.b32.xlu0 %v24, 90
  %v209 = vpop.permute.xlu0 %208
  %210 = vrot.lane.b32.xlu0 %v25, 90
  %v211 = vpop.permute.xlu0 %210
  %vm212 = vcmask 736256
  %v213 = vsel %vm212, %v201, %v203
  %v214 = vsel %vm212, %v203, %v205
  %v215 = vsel %vm212, %v205, %v207
  %v216 = vsel %vm212, %v207, %v209
  %v217 = vsel %vm212, %v209, %v211
  %v224 = vld [vmem:[%s1] sm:$0xff]
  %vm225 = vcmask 588800
  %v227 = vsel %vm225, %v224, 0
  %229 = vmatprep.subr.mxu0 %v21
  %230 = vmatpush1.msra.mxu0 %v20
  %231 = vmatprep.subr.mxu0 %v46
  %232 = vmatpush1.msra.mxu0 %v45
  %233 = vmatprep.subr.mxu0 %v70
  %234 = vmatpush1.msra.mxu0 %v69
  %235 = vmatprep.subr.mxu0 %v94
  %236 = vmatpush1.msra.mxu0 %v93
  %237 = vmatprep.subr.mxu0 %v118
  %238 = vmatpush1.msra.mxu0 %v117
  %239 = vmatprep.subr.mxu0 %v142
  %240 = vmatpush1.msra.mxu0 %v141
  %241 = vmatprep.subr.mxu0 %v166
  %242 = vmatpush1.msra.mxu0 %v165
  %243 = vmatprep.subr.mxu0 %v190
  %244 = vmatpush1.msra.mxu0 %v189
  %245 = vmatprep.subr.mxu0 %v214
  %246 = vmatpush1.msra.mxu0 %v213
  %247 = vmatprep.subr.mxu0 0.0
  %248 = vmatpush1.msra.mxu0 0.0
  %249 = vmatprep.subr.mxu0 0.0
  %250 = vmatpush1.msra.mxu0 0.0
  %251 = vmatprep.subr.mxu0 0.0
  %252 = vmatpush1.msra.mxu0 0.0
  %253 = vmatprep.subr.mxu0 0.0
  %254 = vmatpush1.msra.mxu0 0.0
  %255 = vmatprep.subr.mxu0 0.0
  %256 = vmatpush1.msra.mxu0 0.0
  %257 = vmatprep.subr.mxu0 0.0
  %258 = vmatpush1.msra.mxu0 0.0
  %259 = vmatprep.subr.mxu0 0.0
  %260 = vmatpush1.msra.mxu0 0.0
  %261 = vmatprep.subr.mxu0 0.0
  %262 = vmatpush1.msra.mxu0 0.0
  %263 = vmatprep.subr.mxu0 0.0
  %264 = vmatpush1.msra.mxu0 0.0
  %265 = vmatprep.subr.mxu0 0.0
  %266 = vmatpush1.msra.mxu0 0.0
  %267 = vmatprep.subr.mxu0 0.0
  %268 = vmatpush1.msra.mxu0 0.0
  %269 = vmatprep.subr.mxu0 0.0
  %270 = vmatpush1.msra.mxu0 0.0
  %271 = vmatprep.subr.mxu0 0.0
  %272 = vmatpush1.msra.mxu0 0.0
  %273 = vmatprep.subr.mxu0 0.0
  %274 = vmatpush1.msra.mxu0 0.0
  %275 = vmatprep.subr.mxu0 0.0
  %276 = vmatpush1.msra.mxu0 0.0
  %277 = vmatprep.subr.mxu0 0.0
  %278 = vmatpush1.msra.mxu0 0.0
  %279 = vmatprep.subr.mxu0 0.0
  %280 = vmatpush1.msra.mxu0 0.0
  %281 = vmatprep.subr.mxu0 0.0
  %282 = vmatpush1.msra.mxu0 0.0
  %283 = vmatprep.subr.mxu0 0.0
  %284 = vmatpush1.msra.mxu0 0.0
  %285 = vmatprep.subr.mxu0 0.0
  %286 = vmatpush1.msra.mxu0 0.0
  %287 = vmatprep.subr.mxu0 0.0
  %288 = vmatpush1.msra.mxu0 0.0
  %289 = vmatprep.subr.mxu0 0.0
  %290 = vmatpush1.msra.mxu0 0.0
  %291 = vmatprep.subr.mxu0 0.0
  %292 = vmatpush1.msra.mxu0 0.0
  %293 = vmatprep.mubr.f32.mxu0 0.0
  %294 = vmatmul.mubr.f32.gmra.mrb[0].mxu0 %v227
  %v295 = vpop.f32.mrb[0].mxu0
  %v296 = vadd.f32 0.0, %v295
  %v297 = vpop.f32.mrb[0].mxu0
  %v298 = vadd.f32 0.0, %v297
  %299 = vdwg.mxu0
  %300 = vmatprep.subr.mxu0 %v23
  %301 = vmatpush1.msra.mxu0 %v22
  %302 = vmatprep.subr.mxu0 %v48
  %303 = vmatpush1.msra.mxu0 %v47
  %304 = vmatprep.subr.mxu0 %v72
  %305 = vmatpush1.msra.mxu0 %v71
  %306 = vmatprep.subr.mxu0 %v96
  %307 = vmatpush1.msra.mxu0 %v95
  %308 = vmatprep.subr.mxu0 %v120
  %309 = vmatpush1.msra.mxu0 %v119
  %310 = vmatprep.subr.mxu0 %v144
  %311 = vmatpush1.msra.mxu0 %v143
  %312 = vmatprep.subr.mxu0 %v168
  %313 = vmatpush1.msra.mxu0 %v167
  %314 = vmatprep.subr.mxu0 %v192
  %315 = vmatpush1.msra.mxu0 %v191
  %316 = vmatprep.subr.mxu0 %v216
  %317 = vmatpush1.msra.mxu0 %v215
  %318 = vmatprep.subr.mxu0 0.0
  %319 = vmatpush1.msra.mxu0 0.0
  %320 = vmatprep.subr.mxu0 0.0
  %321 = vmatpush1.msra.mxu0 0.0
  %322 = vmatprep.subr.mxu0 0.0
  %323 = vmatpush1.msra.mxu0 0.0
  %324 = vmatprep.subr.mxu0 0.0
  %325 = vmatpush1.msra.mxu0 0.0
  %326 = vmatprep.subr.mxu0 0.0
  %327 = vmatpush1.msra.mxu0 0.0
  %328 = vmatprep.subr.mxu0 0.0
  %329 = vmatpush1.msra.mxu0 0.0
  %330 = vmatprep.subr.mxu0 0.0
  %331 = vmatpush1.msra.mxu0 0.0
  %332 = vmatprep.subr.mxu0 0.0
  %333 = vmatpush1.msra.mxu0 0.0
  %334 = vmatprep.subr.mxu0 0.0
  %335 = vmatpush1.msra.mxu0 0.0
  %336 = vmatprep.subr.mxu0 0.0
  %337 = vmatpush1.msra.mxu0 0.0
  %338 = vmatprep.subr.mxu0 0.0
  %339 = vmatpush1.msra.mxu0 0.0
  %340 = vmatprep.subr.mxu0 0.0
  %341 = vmatpush1.msra.mxu0 0.0
  %342 = vmatprep.subr.mxu0 0.0
  %343 = vmatpush1.msra.mxu0 0.0
  %344 = vmatprep.subr.mxu0 0.0
  %345 = vmatpush1.msra.mxu0 0.0
  %346 = vmatprep.subr.mxu0 0.0
  %347 = vmatpush1.msra.mxu0 0.0
  %348 = vmatprep.subr.mxu0 0.0
  %349 = vmatpush1.msra.mxu0 0.0
  %350 = vmatprep.subr.mxu0 0.0
  %351 = vmatpush1.msra.mxu0 0.0
  %352 = vmatprep.subr.mxu0 0.0
  %353 = vmatpush1.msra.mxu0 0.0
  %354 = vmatprep.subr.mxu0 0.0
  %355 = vmatpush1.msra.mxu0 0.0
  %356 = vmatprep.subr.mxu0 0.0
  %357 = vmatpush1.msra.mxu0 0.0
  %358 = vmatprep.subr.mxu0 0.0
  %359 = vmatpush1.msra.mxu0 0.0
  %360 = vmatprep.subr.mxu0 0.0
  %361 = vmatpush1.msra.mxu0 0.0
  %362 = vmatprep.subr.mxu0 0.0
  %363 = vmatpush1.msra.mxu0 0.0
  %364 = vmatprep.mubr.f32.mxu0 0.0
  %365 = vmatmul.mubr.f32.gmra.mrb[0].mxu0 %v227
  %v366 = vpop.f32.mrb[0].mxu0
  %v367 = vadd.f32 0.0, %v366
  %v368 = vpop.f32.mrb[0].mxu0
  %v369 = vadd.f32 0.0, %v368
  %370 = vdwg.mxu0
  %371 = vmatprep.subr.mxu0 %v25
  %372 = vmatpush1.msra.mxu0 %v24
  %373 = vmatprep.subr.mxu0 %v43
  %374 = vmatpush1.msra.mxu0 %v49
  %375 = vmatprep.subr.mxu0 %v67
  %376 = vmatpush1.msra.mxu0 %v73
  %377 = vmatprep.subr.mxu0 %v91
  %378 = vmatpush1.msra.mxu0 %v97
  %379 = vmatprep.subr.mxu0 %v115
  %380 = vmatpush1.msra.mxu0 %v121
  %381 = vmatprep.subr.mxu0 %v139
  %382 = vmatpush1.msra.mxu0 %v145
  %383 = vmatprep.subr.mxu0 %v163
  %384 = vmatpush1.msra.mxu0 %v169
  %385 = vmatprep.subr.mxu0 %v187
  %386 = vmatpush1.msra.mxu0 %v193
  %387 = vmatprep.subr.mxu0 %v211
  %388 = vmatpush1.msra.mxu0 %v217
  %389 = vmatprep.subr.mxu0 0.0
  %390 = vmatpush1.msra.mxu0 0.0
  %391 = vmatprep.subr.mxu0 0.0
  %392 = vmatpush1.msra.mxu0 0.0
  %393 = vmatprep.subr.mxu0 0.0
  %394 = vmatpush1.msra.mxu0 0.0
  %395 = vmatprep.subr.mxu0 0.0
  %396 = vmatpush1.msra.mxu0 0.0
  %397 = vmatprep.subr.mxu0 0.0
  %398 = vmatpush1.msra.mxu0 0.0
  %399 = vmatprep.subr.mxu0 0.0
  %400 = vmatpush1.msra.mxu0 0.0
  %401 = vmatprep.subr.mxu0 0.0
  %402 = vmatpush1.msra.mxu0 0.0
  %403 = vmatprep.subr.mxu0 0.0
  %404 = vmatpush1.msra.mxu0 0.0
  %405 = vmatprep.subr.mxu0 0.0
  %406 = vmatpush1.msra.mxu0 0.0
  %407 = vmatprep.subr.mxu0 0.0
  %408 = vmatpush1.msra.mxu0 0.0
  %409 = vmatprep.subr.mxu0 0.0
  %410 = vmatpush1.msra.mxu0 0.0
  %411 = vmatprep.subr.mxu0 0.0
  %412 = vmatpush1.msra.mxu0 0.0
  %413 = vmatprep.subr.mxu0 0.0
  %414 = vmatpush1.msra.mxu0 0.0
  %415 = vmatprep.subr.mxu0 0.0
  %416 = vmatpush1.msra.mxu0 0.0
  %417 = vmatprep.subr.mxu0 0.0
  %418 = vmatpush1.msra.mxu0 0.0
  %419 = vmatprep.subr.mxu0 0.0
  %420 = vmatpush1.msra.mxu0 0.0
  %421 = vmatprep.subr.mxu0 0.0
  %422 = vmatpush1.msra.mxu0 0.0
  %423 = vmatprep.subr.mxu0 0.0
  %424 = vmatpush1.msra.mxu0 0.0
  %425 = vmatprep.subr.mxu0 0.0
  %426 = vmatpush1.msra.mxu0 0.0
  %427 = vmatprep.subr.mxu0 0.0
  %428 = vmatpush1.msra.mxu0 0.0
  %429 = vmatprep.subr.mxu0 0.0
  %430 = vmatpush1.msra.mxu0 0.0
  %431 = vmatprep.subr.mxu0 0.0
  %432 = vmatpush1.msra.mxu0 0.0
  %433 = vmatprep.subr.mxu0 0.0
  %434 = vmatpush1.msra.mxu0 0.0
  %435 = vmatprep.mubr.f32.mxu0 0.0
  %436 = vmatmul.mubr.f32.gmra.mrb[0].mxu0 %v227
  %v437 = vpop.f32.mrb[0].mxu0
  %v438 = vadd.f32 0.0, %v437
  %v439 = vpop.f32.mrb[0].mxu0
  %v440 = vadd.f32 0.0, %v439
  %441 = vdwg.mxu0
  %v442 = vld [vmem:[%s4] sm:$0x3f]
  %v444 = vlaneseq
  %v445 = vshrl.u32 %v444, 7
  %v446 = vsub.s32 0, %v445
  %v447 = vrot.slane %v442, %v446
  %v448 = vlaneseq
  %v449 = vshrl.u32 %v448, 7
  %v450 = vsub.s32 1, %v449
  %v451 = vrot.slane %v442, %v450
  %v452 = vlaneseq
  %v453 = vshrl.u32 %v452, 7
  %v454 = vsub.s32 2, %v453
  %v455 = vrot.slane %v442, %v454
  %v456 = vlaneseq
  %v457 = vshrl.u32 %v456, 7
  %v458 = vsub.s32 3, %v457
  %v459 = vrot.slane %v442, %v458
  %v460 = vlaneseq
  %v461 = vshrl.u32 %v460, 7
  %v462 = vsub.s32 4, %v461
  %v463 = vrot.slane %v442, %v462
  %v464 = vlaneseq
  %v465 = vshrl.u32 %v464, 7
  %v466 = vsub.s32 5, %v465
  %v467 = vrot.slane %v442, %v466
  %v474 = vmul.f32 %v296, %v447
  %v475 = vmul.f32 %v298, %v451
  %v476 = vmul.f32 %v367, %v455
  %v477 = vmul.f32 %v369, %v459
  %v478 = vmul.f32 %v438, %v463
  %v479 = vmul.f32 %v440, %v467
  %v480 = vadd.f32 %v474, %v475
  %v481 = vadd.f32 %v480, %v476
  %v482 = vadd.f32 %v481, %v477
  %v483 = vadd.f32 %v482, %v478
  %vm484 = vcmask 64512
  %v485 = vsel %vm484, %v479, 0.0
  %v486 = vadd.f32 %v483, %v485
  %487 = vadd.xlane.f32.xlu0 %v486
  %v488 = vpop.xlane.xlu0 %487
  %v489 = vmul.f32 %v474, %v296
  %v490 = vmul.f32 %v475, %v298
  %v491 = vmul.f32 %v476, %v367
  %v492 = vmul.f32 %v477, %v369
  %v493 = vmul.f32 %v478, %v438
  %v494 = vmul.f32 %v479, %v440
  %v495 = vadd.f32 %v489, %v490
  %v496 = vadd.f32 %v495, %v491
  %v497 = vadd.f32 %v496, %v492
  %v498 = vadd.f32 %v497, %v493
  %v499 = vsel %vm484, %v494, 0.0
  %v500 = vadd.f32 %v498, %v499
  %501 = vadd.xlane.f32.xlu0 %v500
  %v502 = vpop.xlane.xlu0 %501
  %v503 = vmul.f32 %v488, 0.001953125
  %v504 = vmul.f32 %v502, 0.001953125
  %v505 = vmul.f32 %v503, %v503
  %v506 = vsub.f32 %v504, %v505
  %v507 = vmax.f32 %v506, 0.0
  %v508 = vadd.f32 %v507, 1e-05
  %v509 = vrsqrt.pop %v508
  %v510 = vld [vmem:[%s2] sm:$0xff]
  %v511 = vmul.f32 %v509, %v510
  %v512 = vsub.f32 %v296, %v503
  %v513 = vsub.f32 %v298, %v503
  %v514 = vsub.f32 %v367, %v503
  %v515 = vsub.f32 %v369, %v503
  %v516 = vsub.f32 %v438, %v503
  %v517 = vsub.f32 %v440, %v503
  %519 = vset.pattern.permute.xlu0 0
  %520 = vperm.xlu0 %519, %v511
  %v521 = vpop.permute.xlu0 %520
  %v523 = vmul.f32 %v512, %v521
  %v524 = vmul.f32 %v513, %v521
  %v525 = vmul.f32 %v514, %v521
  %v526 = vmul.f32 %v515, %v521
  %v527 = vmul.f32 %v516, %v521
  %v528 = vmul.f32 %v517, %v521
  %v529 = vld [vmem:[%s3] sm:$0xff]
  %531 = vset.pattern.permute.xlu0 0
  %532 = vperm.xlu0 %531, %v529
  %v533 = vpop.permute.xlu0 %532
  %v535 = vadd.f32 %v523, %v533
  %v536 = vadd.f32 %v524, %v533
  %v537 = vadd.f32 %v525, %v533
  %v538 = vadd.f32 %v526, %v533
  %v539 = vadd.f32 %v527, %v533
  %v540 = vadd.f32 %v528, %v533
  %v541 = vmax.f32 %v535, 0.0
  %v542 = vmax.f32 %v536, 0.0
  %v543 = vmax.f32 %v537, 0.0
  %v544 = vmax.f32 %v538, 0.0
  %v545 = vmax.f32 %v539, 0.0
  %v546 = vmax.f32 %v540, 0.0
  %547 = vst [vmem:[%s5] sm:$0xff] %v541
  %548 = vst [vmem:[%s5 + $0x8] sm:$0xff] %v542
  %549 = vst [vmem:[%s5 + $0x10] sm:$0xff] %v543
  %550 = vst [vmem:[%s5 + $0x18] sm:$0xff] %v544
  %551 = vst [vmem:[%s5 + $0x20] sm:$0xff] %v545
  %552 = vst.msk [vmem:[%s5 + $0x28] sm:$0xff] %vm484, %v546
  // Predicated region
  $region22: #{_lambda_.7} parent=0 // pred_check
    _
  $region23: #{_lambda_.7} parent=0 // pred_check_branch
    %554 = sbr.rel (0) target = $region25
  $region24: #{_lambda_.7} parent=0 // pred_region
    _
  $region25: #{_lambda_.7} parent=0 // pred_fallthru
    _
  // Predicated region
  $region26: #{_lambda_.7} parent=0 // pred_check
    _
  $region27: #{_lambda_.7} parent=0 // pred_check_branch
    %556 = sbr.rel (0) target = $region29
  $region28: #{_lambda_.7} parent=0 // pred_region
    _
  $region29: #{_lambda_.7} parent=0 // pred_fallthru
    _

</llo_original>
